<compile_context>
chip_gen: v7x
topology: tpu7x:2x2x1
jax: 0.10.0
libtpu: 0.0.40
codegen_flags: <defaults>
</compile_context>

<pallas_src>
import functools

import jax
import jax.numpy as jnp
from jax.experimental import pallas as pl
from jax.experimental.pallas import tpu as pltpu


def _cdiv(a, b):
    return -(-a // b)


def _vmem_capacity_bytes():
    try:
        info = pltpu.get_tpu_info()
        cap = getattr(info, "vmem_capacity_bytes", None)
        if cap:
            return int(cap)
    except Exception:
        pass
    return 64 * 1024 * 1024  # conservative (v7x per-TC physical VMEM)


def _loss_kernel(x_ref, xh_ref, mu_ref, ls_ref, out_ref, acc_ref, *,
                 tiles_per_core, tiled_axis, tile_len, valid_len, need_mask,
                 b, dim_z, prior_weight, marginal_weight):
    c = pl.program_id(0)              # "core" (parallel) axis
    t = pl.program_id(1)              # streamed tile (arbitrary/reduction) axis
    nt = pl.num_programs(1)

    # ---- per-core element-wise SSE accumulator (VMEM, tile-shaped) ----
    @pl.when(t == 0)
    def _():
        acc_ref[...] = jnp.zeros_like(acc_ref)

    # Subtract in the input dtype, widen only for square + accumulate.
    diff = (xh_ref[...] - x_ref[...]).astype(jnp.float32)
    if need_mask:
        # Mask ragged / overhang tiles by LOGICAL index (mask before squaring
        # so garbage lanes cannot propagate NaN/Inf).
        tl = c * tiles_per_core + t
        ids = jax.lax.broadcasted_iota(jnp.int32, diff.shape, tiled_axis)
        ids = ids + tl * tile_len
        diff = jnp.where(ids < valid_len, diff, 0.0)
    acc_ref[...] += diff * diff

    # ---- latent terms + per-core finalize (tiny; runs once per core) ----
    @pl.when(t == nt - 1)
    def _():
        sse = jnp.sum(acc_ref[...])

        mu = mu_ref[...].astype(jnp.float32)
        ls = ls_ref[...].astype(jnp.float32)

        sigma_sq = jnp.exp(ls)          # single EUP exp, reused below
        sigma_sq_inv = 1.0 / sigma_sq
        mu2 = mu * mu

        # prior KL: mean(-0.5 * (-mu^2 - exp(ls) + 1 + ls))
        inv_bz = 1.0 / float(b * dim_z)
        prior_loss = 0.5 * jnp.sum(mu2 + sigma_sq - 1.0 - ls) * inv_bz

        # all-pairs gaussian KL, reduced to column sums over the batch axis:
        #   mean(first)  = (1/B^2) sum_k (sum_i sig[i,k]) (sum_j siginv[j,k])
        #   mean(r)      = (1/B^2) sum_k (sum_i mu2[i,k]) (sum_j siginv[j,k])
        #   mean(cross)  = (1/B^2) sum_k (sum_i mu[i,k]) (sum_j mu*siginv[j,k])
        #   mean(r2)     = (1/B)   sum_{i,k} mu2[i,k] siginv[i,k]
        #   mean(third)  = 0 exactly (antisymmetric) -> dropped
        s_sig = jnp.sum(sigma_sq, axis=0, keepdims=True)
        s_siginv = jnp.sum(sigma_sq_inv, axis=0, keepdims=True)
        s_mu = jnp.sum(mu, axis=0, keepdims=True)
        s_mu2 = jnp.sum(mu2, axis=0, keepdims=True)
        s_mu_siginv = jnp.sum(mu * sigma_sq_inv, axis=0, keepdims=True)

        inv_b2 = 1.0 / float(b * b)
        mean_first = jnp.sum(s_sig * s_siginv) * inv_b2
        mean_r = jnp.sum(s_mu2 * s_siginv) * inv_b2
        mean_cross = jnp.sum(s_mu * s_mu_siginv) * inv_b2
        mean_r2 = jnp.sum(mu2 * sigma_sq_inv) * (1.0 / float(b))
        marginal_loss = 0.5 * (mean_first + mean_r - 2.0 * mean_cross
                               + mean_r2 - float(dim_z))

        out_ref[0, 0] = sse
        out_ref[0, 1] = (prior_weight * prior_loss
                         + marginal_weight * marginal_loss)


def inv_loss_moyer_2018(x, x_hat, z_mu, z_log_sigma_sq,
                        recon_weight=1.0, prior_weight=1.0,
                        marginal_weight=1.0, max_tile_elems=None):
    b = x.shape[0]
    d = 1
    for s in x.shape[1:]:
        d *= int(s)
    n = b * d
    dim_z = z_mu.shape[1]
    itemsize = max(jnp.dtype(x.dtype).itemsize, jnp.dtype(x_hat.dtype).itemsize)

    # ---- generation-aware VMEM budget for the streamed double-buffers ----
    vmem_cap = _vmem_capacity_bytes()
    stream_budget = max(8 << 20, min(int(0.35 * vmem_cap), 48 << 20))
    if max_tile_elems is None:
        # 2 inputs x 2 pipeline buffers x itemsize + 4B f32 accumulator / elem
        max_tile_elems = max(1024, stream_budget // (4 * itemsize + 4))

    # ---- layout selection (no jnp.pad: only free reshapes) ----
    view_shape = None
    # Mode A: sublane+lane dense (rows, lanes) view of the flat stream.
    for lane in (1024, 512, 256, 128):
        if n % (8 * lane) == 0 and n // lane >= 8:
            rows, cols = n // lane, lane
            tr_cap = max(8, (max_tile_elems // cols) // 8 * 8)
            tr = rows if rows <= tr_cap else tr_cap
            view_shape, tiled_axis, tile, total = (rows, cols), 0, (tr, cols), rows
            break
    if view_shape is None:
        # Mode B: (B, D) view, tile over D, ragged tail masked in-kernel.
        td_cap = max(128, (max_tile_elems // max(b, 1)) // 128 * 128)
        td = d if d <= td_cap else td_cap
        view_shape, tiled_axis, tile, total = (b, d), 1, (b, td), d

    x_v = x.reshape(view_shape)
    xh_v = x_hat.reshape(view_shape)

    tile_len = tile[tiled_axis]
    t_total = _cdiv(total, tile_len)
    num_split = 2 if t_total >= 2 else 1        # v7x: 2 TensorCores; harmless on 1-TC
    tpc = _cdiv(t_total, num_split)             # tiles per core
    covered = num_split * tpc * tile_len
    need_mask = covered != total

    if tiled_axis == 0:
        stream_map = lambda c, t: (jnp.minimum(c * tpc + t, t_total - 1), 0)
    else:
        stream_map = lambda c, t: (0, jnp.minimum(c * tpc + t, t_total - 1))
    latent_map = lambda c, t: (0, 0)            # tiny latent blocks stay resident

    kernel = functools.partial(
        _loss_kernel,
        tiles_per_core=tpc, tiled_axis=tiled_axis, tile_len=tile_len,
        valid_len=total, need_mask=need_mask,
        b=b, dim_z=dim_z,
        prior_weight=float(prior_weight),
        marginal_weight=float(marginal_weight),
    )

    cost = pl.CostEstimate(
        flops=int(3 * n + 20 * b * dim_z),
        transcendentals=int(b * dim_z),
        bytes_accessed=int(2 * n * itemsize + 2 * b * dim_z * 4 + num_split * 8),
    )

    out = pl.pallas_call(
        kernel,
        out_shape=jax.ShapeDtypeStruct((num_split, 2), jnp.float32),
        grid=(num_split, tpc),
        in_specs=[
            pl.BlockSpec(tile, stream_map),      # x tile (lane/sublane dense)
            pl.BlockSpec(tile, stream_map),      # x_hat tile
            pl.BlockSpec((b, dim_z), latent_map,
                         memory_space=pltpu.MemorySpace.VMEM),
            pl.BlockSpec((b, dim_z), latent_map,
                         memory_space=pltpu.MemorySpace.VMEM),
        ],
        # Per-core (1,2) SMEM block: [sse_partial, weighted latent scalar].
        out_specs=pl.BlockSpec((1, 2), lambda c, t: (c, 0),
                               memory_space=pltpu.MemorySpace.SMEM),
        scratch_shapes=[pltpu.VMEM(tile, jnp.float32)],
        compiler_params=pltpu.CompilerParams(
            dimension_semantics=("parallel", "arbitrary"),
            vmem_limit_bytes=int(min(vmem_cap, stream_budget + (8 << 20)))),
        cost_estimate=cost,
    )(x_v, xh_v, z_mu, z_log_sigma_sq)

    # Final combine on a handful of scalars (per perf review: do it wrapper-side
    # instead of cross-core sync inside the kernel).
    sse_total = jnp.sum(out[:, 0])
    mse_loss = sse_total / float(n)
    latent = out[0, 1]                           # identical on every core
    return recon_weight * mse_loss * (28.0 * 28.0) + latent


def _reference_loss(x, x_hat, z_mu, z_log_sigma_sq,
                    recon_weight=1.0, prior_weight=1.0, marginal_weight=1.0):
    # Pure-JAX reference mirroring the PyTorch code (incl. the zero-mean
    # antisymmetric third term, for validation of the algebraic rewrite).
    mse = jnp.mean((x_hat - x) ** 2)
    mu, ls = z_mu, z_log_sigma_sq
    prior = jnp.mean(-0.5 * (-(mu * mu) - jnp.exp(ls) + 1.0 + ls))
    sig = jnp.exp(ls)
    siginv = 1.0 / sig
    first = sig @ siginv.T
    r = (mu * mu) @ siginv.T
    r2 = jnp.sum(mu * mu * siginv, axis=1, keepdims=True)
    second = r - 2.0 * (mu @ (mu * siginv).T) + r2
    det = jnp.sum(ls, axis=1, keepdims=True)
    third = det - det.T
    marginal = jnp.mean(0.5 * (first + second + third - mu.shape[1]))
    return (recon_weight * mse * (28 * 28)
            + prior_weight * prior + marginal_weight * marginal)


if __name__ == "__main__":
    key = jax.random.PRNGKey(0)
    k1, k2, k3, k4 = jax.random.split(key, 4)
    Z = 32

    # --- Test 1: module-spec shapes; dense single-tile fast path (mode A) ---
    B, C, H, W = 2, 4, 16, 16
    x = jax.random.normal(k1, (B, C, H, W), dtype=jnp.float32)
    x_hat = jax.random.normal(k2, (B, C, H, W), dtype=jnp.float32)
    z_mu = jax.random.normal(k3, (B, Z), dtype=jnp.float32)
    z_ls = 0.1 * jax.random.normal(k4, (B, Z), dtype=jnp.float32)
    ref = _reference_loss(x, x_hat, z_mu, z_ls)
    loss = jax.block_until_ready(inv_loss_moyer_2018(x, x_hat, z_mu, z_ls))
    assert jnp.allclose(loss, ref, rtol=1e-5, atol=1e-4), (loss, ref)

    # --- Test 2: sublane-dense multi-tile path with core split + overhang mask
    B2 = 12
    x2 = jax.random.normal(k1, (B2, C, H, W), dtype=jnp.float32)
    xh2 = jax.random.normal(k2, (B2, C, H, W), dtype=jnp.float32)
    mu2 = jax.random.normal(k3, (B2, Z), dtype=jnp.float32)
    ls2 = 0.1 * jax.random.normal(k4, (B2, Z), dtype=jnp.float32)
    ref2 = _reference_loss(x2, xh2, mu2, ls2)
    loss2 = jax.block_until_ready(
        inv_loss_moyer_2018(x2, xh2, mu2, ls2, max_tile_elems=8 * 512))
    assert jnp.allclose(loss2, ref2, rtol=1e-5, atol=1e-4), (loss2, ref2)

    # --- Test 3: ragged feature dim (no pad): in-kernel lane masking (mode B)
    x3 = jax.random.normal(k1, (2, 3, 9, 13), dtype=jnp.float32)
    xh3 = jax.random.normal(k2, (2, 3, 9, 13), dtype=jnp.float32)
    mu3 = jax.random.normal(k3, (2, Z), dtype=jnp.float32)
    ls3 = 0.1 * jax.random.normal(k4, (2, Z), dtype=jnp.float32)
    ref3 = _reference_loss(x3, xh3, mu3, ls3)
    loss3 = jax.block_until_ready(
        inv_loss_moyer_2018(x3, xh3, mu3, ls3, max_tile_elems=256))
    assert jnp.allclose(loss3, ref3, rtol=1e-5, atol=1e-4), (loss3, ref3)

    print("KERNEL_OK")
</pallas_src>

<mosaic_0001>
module attributes {stable_mosaic.version = 11 : i64} {
  func.func @_loss_kernel(%arg0: i32, %arg1: i32, %arg2: memref<8x256xf32, #tpu.memory_space<vmem>>, %arg3: memref<8x256xf32, #tpu.memory_space<vmem>>, %arg4: memref<2x32xf32, #tpu.memory_space<vmem>>, %arg5: memref<2x32xf32, #tpu.memory_space<vmem>>, %arg6: memref<1x2xf32, #tpu.memory_space<smem>>, %arg7: memref<8x256xf32, #tpu.memory_space<vmem>>) attributes {dimension_semantics = [#tpu.dimension_semantics<parallel>, #tpu.dimension_semantics<arbitrary>], iteration_bounds = array<i64: 1, 1>, scalar_prefetch = 0 : i64, scratch_operands = 1 : i64, tpu.core_type = #tpu.core_type<tc>, window_params = [{transform_indices = @transform_0, window_bounds = array<i64: 8, 256>}, {transform_indices = @transform_1, window_bounds = array<i64: 8, 256>}, {pipeline_mode = #tpu.pipeline_mode<synchronous>, transform_indices = @transform_2, window_bounds = array<i64: 2, 32>}, {pipeline_mode = #tpu.pipeline_mode<synchronous>, transform_indices = @transform_3, window_bounds = array<i64: 2, 32>}, {transform_indices = @transform_4, window_bounds = array<i64: 1, 2>}]} {
    %c0_i32 = arith.constant 0 : i32
    %0 = arith.cmpi eq, %arg1, %c0_i32 : i32
    %1 = arith.extui %0 : i1 to i32
    %c0_i32_0 = arith.constant 0 : i32
    %2 = arith.cmpi ne, %1, %c0_i32_0 : i32
    scf.if %2 {
      %cst = arith.constant 0.000000e+00 : f32
      %13 = vector.broadcast %cst : f32 to vector<8x256xf32>
      %c0_10 = arith.constant 0 : index
      %c0_11 = arith.constant 0 : index
      %14 = vector.load %arg7[%c0_10, %c0_11] : memref<8x256xf32, #tpu.memory_space<vmem>>, vector<8x256xf32>
      tpu.vector_store %arg7[%c0_10, %c0_11], %13 {strides = array<i32>} : memref<8x256xf32, #tpu.memory_space<vmem>>, vector<8x256xf32>,
    } else {
    }
    %c0 = arith.constant 0 : index
    %c0_1 = arith.constant 0 : index
    %3 = vector.load %arg3[%c0, %c0_1] : memref<8x256xf32, #tpu.memory_space<vmem>>, vector<8x256xf32>
    %c0_2 = arith.constant 0 : index
    %c0_3 = arith.constant 0 : index
    %4 = vector.load %arg2[%c0_2, %c0_3] : memref<8x256xf32, #tpu.memory_space<vmem>>, vector<8x256xf32>
    %5 = arith.subf %3, %4 : vector<8x256xf32>
    %c0_4 = arith.constant 0 : index
    %c0_5 = arith.constant 0 : index
    %6 = vector.load %arg7[%c0_4, %c0_5] : memref<8x256xf32, #tpu.memory_space<vmem>>, vector<8x256xf32>
    %7 = arith.mulf %5, %5 : vector<8x256xf32>
    %8 = arith.addf %6, %7 : vector<8x256xf32>
    %c0_6 = arith.constant 0 : index
    %c0_7 = arith.constant 0 : index
    %9 = vector.load %arg7[%c0_6, %c0_7] : memref<8x256xf32, #tpu.memory_space<vmem>>, vector<8x256xf32>
    tpu.vector_store %arg7[%c0_6, %c0_7], %8 {strides = array<i32>} : memref<8x256xf32, #tpu.memory_space<vmem>>, vector<8x256xf32>,
    %c0_i32_8 = arith.constant 0 : i32
    %10 = arith.cmpi eq, %arg1, %c0_i32_8 : i32
    %11 = arith.extui %10 : i1 to i32
    %c0_i32_9 = arith.constant 0 : i32
    %12 = arith.cmpi ne, %11, %c0_i32_9 : i32
    scf.if %12 {
      %c0_10 = arith.constant 0 : index
      %c0_11 = arith.constant 0 : index
      %13 = vector.load %arg7[%c0_10, %c0_11] : memref<8x256xf32, #tpu.memory_space<vmem>>, vector<8x256xf32>
      %14 = vector.shape_cast %13 : vector<8x256xf32> to vector<1x8x256xf32>
      %cst = arith.constant dense<0.000000e+00> : vector<1xf32>
      %15 = vector.multi_reduction <add>, %14, %cst [1, 2] : vector<1x8x256xf32> to vector<1xf32>
      %16 = vector.shape_cast %15 : vector<1xf32> to vector<1x1x1xf32>
      %17 = vector.extract %16[0, 0, 0] : f32 from vector<1x1x1xf32>
      %c0_12 = arith.constant 0 : index
      %c0_13 = arith.constant 0 : index
      %18 = vector.load %arg4[%c0_12, %c0_13] : memref<2x32xf32, #tpu.memory_space<vmem>>, vector<2x32xf32>
      %c0_14 = arith.constant 0 : index
      %c0_15 = arith.constant 0 : index
      %19 = vector.load %arg5[%c0_14, %c0_15] : memref<2x32xf32, #tpu.memory_space<vmem>>, vector<2x32xf32>
      %20 = math.exp %19 : vector<2x32xf32>
      %cst_16 = arith.constant 1.000000e+00 : f32
      %21 = vector.broadcast %cst_16 : f32 to vector<2x32xf32>
      %22 = arith.divf %21, %20 : vector<2x32xf32>
      %23 = arith.mulf %18, %18 : vector<2x32xf32>
      %24 = arith.addf %23, %20 : vector<2x32xf32>
      %cst_17 = arith.constant 1.000000e+00 : f32
      %25 = vector.broadcast %cst_17 : f32 to vector<2x32xf32>
      %26 = arith.subf %24, %25 : vector<2x32xf32>
      %27 = arith.subf %26, %19 : vector<2x32xf32>
      %28 = vector.shape_cast %27 : vector<2x32xf32> to vector<1x2x32xf32>
      %cst_18 = arith.constant dense<0.000000e+00> : vector<1xf32>
      %29 = vector.multi_reduction <add>, %28, %cst_18 [1, 2] : vector<1x2x32xf32> to vector<1xf32>
      %30 = vector.shape_cast %29 : vector<1xf32> to vector<1x1x1xf32>
      %31 = vector.extract %30[0, 0, 0] : f32 from vector<1x1x1xf32>
      %cst_19 = arith.constant 5.000000e-01 : f32
      %32 = arith.mulf %cst_19, %31 : f32
      %cst_20 = arith.constant 1.562500e-02 : f32
      %33 = arith.mulf %32, %cst_20 : f32
      %cst_21 = arith.constant dense<0.000000e+00> : vector<32xf32>
      %34 = vector.multi_reduction <add>, %20, %cst_21 [0] : vector<2x32xf32> to vector<32xf32>
      %35 = vector.shape_cast %34 : vector<32xf32> to vector<1x32xf32>
      %cst_22 = arith.constant dense<0.000000e+00> : vector<32xf32>
      %36 = vector.multi_reduction <add>, %22, %cst_22 [0] : vector<2x32xf32> to vector<32xf32>
      %37 = vector.shape_cast %36 : vector<32xf32> to vector<1x32xf32>
      %cst_23 = arith.constant dense<0.000000e+00> : vector<32xf32>
      %38 = vector.multi_reduction <add>, %18, %cst_23 [0] : vector<2x32xf32> to vector<32xf32>
      %39 = vector.shape_cast %38 : vector<32xf32> to vector<1x32xf32>
      %cst_24 = arith.constant dense<0.000000e+00> : vector<32xf32>
      %40 = vector.multi_reduction <add>, %23, %cst_24 [0] : vector<2x32xf32> to vector<32xf32>
      %41 = vector.shape_cast %40 : vector<32xf32> to vector<1x32xf32>
      %42 = arith.mulf %18, %22 : vector<2x32xf32>
      %cst_25 = arith.constant dense<0.000000e+00> : vector<32xf32>
      %43 = vector.multi_reduction <add>, %42, %cst_25 [0] : vector<2x32xf32> to vector<32xf32>
      %44 = vector.shape_cast %43 : vector<32xf32> to vector<1x32xf32>
      %45 = arith.mulf %35, %37 : vector<1x32xf32>
      %46 = vector.shape_cast %45 : vector<1x32xf32> to vector<1x1x32xf32>
      %cst_26 = arith.constant dense<0.000000e+00> : vector<1xf32>
      %47 = vector.multi_reduction <add>, %46, %cst_26 [1, 2] : vector<1x1x32xf32> to vector<1xf32>
      %48 = vector.shape_cast %47 : vector<1xf32> to vector<1x1x1xf32>
      %49 = vector.extract %48[0, 0, 0] : f32 from vector<1x1x1xf32>
      %cst_27 = arith.constant 2.500000e-01 : f32
      %50 = arith.mulf %49, %cst_27 : f32
      %51 = arith.mulf %41, %37 : vector<1x32xf32>
      %52 = vector.shape_cast %51 : vector<1x32xf32> to vector<1x1x32xf32>
      %cst_28 = arith.constant dense<0.000000e+00> : vector<1xf32>
      %53 = vector.multi_reduction <add>, %52, %cst_28 [1, 2] : vector<1x1x32xf32> to vector<1xf32>
      %54 = vector.shape_cast %53 : vector<1xf32> to vector<1x1x1xf32>
      %55 = vector.extract %54[0, 0, 0] : f32 from vector<1x1x1xf32>
      %cst_29 = arith.constant 2.500000e-01 : f32
      %56 = arith.mulf %55, %cst_29 : f32
      %57 = arith.mulf %39, %44 : vector<1x32xf32>
      %58 = vector.shape_cast %57 : vector<1x32xf32> to vector<1x1x32xf32>
      %cst_30 = arith.constant dense<0.000000e+00> : vector<1xf32>
      %59 = vector.multi_reduction <add>, %58, %cst_30 [1, 2] : vector<1x1x32xf32> to vector<1xf32>
      %60 = vector.shape_cast %59 : vector<1xf32> to vector<1x1x1xf32>
      %61 = vector.extract %60[0, 0, 0] : f32 from vector<1x1x1xf32>
      %cst_31 = arith.constant 2.500000e-01 : f32
      %62 = arith.mulf %61, %cst_31 : f32
      %63 = arith.mulf %23, %22 : vector<2x32xf32>
      %64 = vector.shape_cast %63 : vector<2x32xf32> to vector<1x2x32xf32>
      %cst_32 = arith.constant dense<0.000000e+00> : vector<1xf32>
      %65 = vector.multi_reduction <add>, %64, %cst_32 [1, 2] : vector<1x2x32xf32> to vector<1xf32>
      %66 = vector.shape_cast %65 : vector<1xf32> to vector<1x1x1xf32>
      %67 = vector.extract %66[0, 0, 0] : f32 from vector<1x1x1xf32>
      %cst_33 = arith.constant 5.000000e-01 : f32
      %68 = arith.mulf %67, %cst_33 : f32
      %69 = arith.addf %50, %56 : f32
      %cst_34 = arith.constant 2.000000e+00 : f32
      %70 = arith.mulf %cst_34, %62 : f32
      %71 = arith.subf %69, %70 : f32
      %72 = arith.addf %71, %68 : f32
      %cst_35 = arith.constant 3.200000e+01 : f32
      %73 = arith.subf %72, %cst_35 : f32
      %cst_36 = arith.constant 5.000000e-01 : f32
      %74 = arith.mulf %cst_36, %73 : f32
      %c0_37 = arith.constant 0 : index
      %c0_38 = arith.constant 0 : index
      %75 = memref.load %arg6[%c0_37, %c0_38] : memref<1x2xf32, #tpu.memory_space<smem>>
      memref.store %17, %arg6[%c0_37, %c0_38] : memref<1x2xf32, #tpu.memory_space<smem>>
      %cst_39 = arith.constant 1.000000e+00 : f32
      %76 = arith.mulf %cst_39, %33 : f32
      %cst_40 = arith.constant 1.000000e+00 : f32
      %77 = arith.mulf %cst_40, %74 : f32
      %78 = arith.addf %76, %77 : f32
      %c0_41 = arith.constant 0 : index
      %c1 = arith.constant 1 : index
      %79 = memref.load %arg6[%c0_41, %c1] : memref<1x2xf32, #tpu.memory_space<smem>>
      memref.store %78, %arg6[%c0_41, %c1] : memref<1x2xf32, #tpu.memory_space<smem>>
    } else {
    }
    return
  }
  func.func @transform_0(%arg0: i32, %arg1: i32) -> (i32, i32) {
    %c1_i32 = arith.constant 1 : i32
    %0 = arith.muli %arg0, %c1_i32 : i32
    %1 = arith.addi %0, %arg1 : i32
    %c0_i32 = arith.constant 0 : i32
    %2 = arith.minsi %1, %c0_i32 : i32
    %c0_i32_0 = arith.constant 0 : i32
    %c0_i32_1 = arith.constant 0 : i32
    return %2, %c0_i32_0 : i32, i32
  }
  func.func @transform_1(%arg0: i32, %arg1: i32) -> (i32, i32) {
    %c1_i32 = arith.constant 1 : i32
    %0 = arith.muli %arg0, %c1_i32 : i32
    %1 = arith.addi %0, %arg1 : i32
    %c0_i32 = arith.constant 0 : i32
    %2 = arith.minsi %1, %c0_i32 : i32
    %c0_i32_0 = arith.constant 0 : i32
    %c0_i32_1 = arith.constant 0 : i32
    return %2, %c0_i32_0 : i32, i32
  }
  func.func @transform_2(%arg0: i32, %arg1: i32) -> (i32, i32) {
    %c0_i32 = arith.constant 0 : i32
    %c0_i32_0 = arith.constant 0 : i32
    %c0_i32_1 = arith.constant 0 : i32
    return %c0_i32, %c0_i32_0 : i32, i32
  }
  func.func @transform_3(%arg0: i32, %arg1: i32) -> (i32, i32) {
    %c0_i32 = arith.constant 0 : i32
    %c0_i32_0 = arith.constant 0 : i32
    %c0_i32_1 = arith.constant 0 : i32
    return %c0_i32, %c0_i32_0 : i32, i32
  }
  func.func @transform_4(%arg0: i32, %arg1: i32) -> (i32, i32) {
    %c0_i32 = arith.constant 0 : i32
    %c0_i32_0 = arith.constant 0 : i32
    return %arg0, %c0_i32 : i32, i32
  }
}

</mosaic_0001>

<llo_original>
// kernel: tpu_custom_call.1
$region0: #{tpu_custom_call.1}
  #allocation0 [shape = 'u32[]', space=smem, size = 0x4, offset = 0x4, fixed_abs, tag = 'smem constant byte address 0x4 - core index']
  #allocation1 [shape = 'u32[144,128]{1,0:T(1,128)}', space=vmem, size = 0x12000, scoped, tag = 'internal scratch']
  #allocation2 [shape = 'f32[8,256]{1,0:T(8,128)}', space=vmem, size = 0x2000, scoped, tag = 'scratch operand']
  %s0 = inlined_call_operand.hbm [shape: f32[8,256], index: 0, kind: input, shape index: {}]
  %s1 = inlined_call_operand.hbm [shape: f32[8,256], index: 1, kind: input, shape index: {}]
  %s2 = inlined_call_operand.vmem [shape: f32[2,32], index: 2, kind: input, shape index: {}]
  %s3 = inlined_call_operand.vmem [shape: f32[2,32], index: 3, kind: input, shape index: {}]
  %s4 = inlined_call_operand.hbm [shape: f32[1,2], index: 4, kind: output, shape index: {}]
  %s5 = sld [smem:[#allocation0]]
  $region42: #{tpu_custom_call.1} parent=0
    _
  %s7 = ssub.s32 1, %s5
  %s8 = scalar_select 0, %s7, %s5
  $region1: #{tpu_custom_call.1} parent=0
    #allocation3 [shape = 'u8[8192]{0}', space=vmem, size = 0x2000, scoped, tag = 'input window, operand 0, single buffered']
    #allocation4 [shape = 's32[1]{0}', space=sflag, size = 0x4, scoped, tag = 'scoped memory for tpu_custom_call.1']
    #allocation5 [shape = 's32[1]{0}', space=sflag, size = 0x4, scoped, tag = 'scoped memory for tpu_custom_call.1']
    #allocation6 [shape = 'u8[8192]{0}', space=vmem, size = 0x2000, scoped, tag = 'input window, operand 1, single buffered']
    #allocation7 [shape = 's32[1]{0}', space=sflag, size = 0x4, scoped, tag = 'scoped memory for tpu_custom_call.1']
    #allocation8 [shape = 'u8[512]{0}', space=smem, size = 0x200, scoped, tag = 'output window, operand 0, single buffered']
    %9 = vsyncpa [#allocation4], 0
    %10 = vsyncpa [#allocation7], 0
    %11 = vsyncpa [#allocation5], 0
    // Predicated region
    $region2: #{tpu_custom_call.1} parent=1 // pred_check
      _
    $region3: #{tpu_custom_call.1} parent=1 // pred_check_branch
      %13 = sbr.rel (0) target = $region5
    $region4: #{tpu_custom_call.1} parent=1 // pred_region
      %s14 = sadd.s32 0, 0
      %p15 = scmp.lt.s32.totalorder %s14, 0
      %s16 = scalar_select %p15, %s14, 0
      %s18 = ssub.s32 256, 256
      %19 = vsyncadd [#allocation4], %s18
      %s20 = smul.addr %s16, 2
      %s21 = smul.addr %s20, 128
      %s22 = scalar_lea.hbm %s0, %s21
      %s24 = sshll.u32 [#allocation3], 4
      %s25 = int_to_ptr.vmem [resolvable:$true] %s24
      %27 = dma.hbm_to_vmem [thread:$0]  %s22, 256, %s25, [#allocation4]
    $region5: #{tpu_custom_call.1} parent=1 // pred_fallthru
      _
    // Predicated region
    $region6: #{tpu_custom_call.1} parent=1 // pred_check
      _
    $region7: #{tpu_custom_call.1} parent=1 // pred_check_branch
      %29 = sbr.rel (0) target = $region9
    $region8: #{tpu_custom_call.1} parent=1 // pred_region
      %s30 = sadd.s32 0, 0
      %p31 = scmp.lt.s32.totalorder %s30, 0
      %s32 = scalar_select %p31, %s30, 0
      %s34 = ssub.s32 256, 256
      %35 = vsyncadd [#allocation7], %s34
      %s36 = smul.addr %s32, 2
      %s37 = smul.addr %s36, 128
      %s38 = scalar_lea.hbm %s1, %s37
      %s40 = sshll.u32 [#allocation6], 4
      %s41 = int_to_ptr.vmem [resolvable:$true] %s40
      %43 = dma.hbm_to_vmem [thread:$0]  %s38, 256, %s41, [#allocation7]
    $region9: #{tpu_custom_call.1} parent=1 // pred_fallthru
      _
    // Predicated region
    $region10: #{tpu_custom_call.1} parent=1 // pred_check
      _
    $region11: #{tpu_custom_call.1} parent=1 // pred_check_branch
      %45 = sbr.rel (0) target = $region13
    $region12: #{tpu_custom_call.1} parent=1 // pred_region
      _
    $region13: #{tpu_custom_call.1} parent=1 // pred_fallthru
      _
    // Predicated region
    $region14: #{tpu_custom_call.1} parent=1 // pred_check
      _
    $region15: #{tpu_custom_call.1} parent=1 // pred_check_branch
      %47 = sbr.rel (0) target = $region17
    $region16: #{tpu_custom_call.1} parent=1 // pred_region
      _
    $region17: #{tpu_custom_call.1} parent=1 // pred_fallthru
      _
    // Predicated region
    $region18: #{tpu_custom_call.1} parent=1 // pred_check
      _
    $region19: #{tpu_custom_call.1} parent=1 // pred_check_branch
      %49 = sbr.rel (0) target = $region21
    $region20: #{tpu_custom_call.1} parent=1 // pred_region
      %50 = dma.done [#allocation4], 256
    $region21: #{tpu_custom_call.1} parent=1 // pred_fallthru
      _
    // Predicated region
    $region22: #{tpu_custom_call.1} parent=1 // pred_check
      _
    $region23: #{tpu_custom_call.1} parent=1 // pred_check_branch
      %52 = sbr.rel (0) target = $region25
    $region24: #{tpu_custom_call.1} parent=1 // pred_region
      %53 = dma.done [#allocation7], 256
    $region25: #{tpu_custom_call.1} parent=1 // pred_fallthru
      _
    %s54 = sadd.s32 0, 0
    %p55 = scmp.lt.s32.totalorder %s54, 0
    %s56 = scalar_select %p55, %s54, 0
    %s57 = sadd.s32 0, 0
    %p58 = scmp.lt.s32.totalorder %s57, 0
    %s59 = scalar_select %p58, %s57, 0
    %p60 = scmp.eq.s32.totalorder 0, 0
    // Predicated region
    $region26: #{tpu_custom_call.1} parent=1 // pred_check
      %p61 = pneg %p60
    $region27: #{tpu_custom_call.1} parent=1 // pred_check_branch
      %63 = sbr.rel (%p61) target = $region29
    $region28: #{tpu_custom_call.1} parent=1 // pred_region
      %64 = vst [vmem:[#allocation2] sm:$0xff] 0.0
      %65 = vst [vmem:[#allocation2 + $0x8] sm:$0xff] 0.0
    $region29: #{tpu_custom_call.1} parent=1 // pred_fallthru
      _
    %v66 = vld [vmem:[#allocation6] sm:$0xff]
    %v67 = vld [vmem:[#allocation6 + $0x8] sm:$0xff]
    %v68 = vld [vmem:[#allocation3] sm:$0xff]
    %v69 = vld [vmem:[#allocation3 + $0x8] sm:$0xff]
    %v70 = vsub.f32 %v66, %v68
    %v71 = vsub.f32 %v67, %v69
    %v72 = vld [vmem:[#allocation2] sm:$0xff]
    %v73 = vld [vmem:[#allocation2 + $0x8] sm:$0xff]
    %v74 = vmul.f32 %v70, %v70
    %v75 = vmul.f32 %v71, %v71
    %v76 = vadd.f32 %v72, %v74
    %v77 = vadd.f32 %v73, %v75
    %78 = vst [vmem:[#allocation2] sm:$0xff] %v76
    %79 = vst [vmem:[#allocation2 + $0x8] sm:$0xff] %v77
    // Predicated region
    $region30: #{tpu_custom_call.1} parent=1 // pred_check
      %p80 = pneg %p60
    $region31: #{tpu_custom_call.1} parent=1 // pred_check_branch
      %82 = sbr.rel (%p80) target = $region33
    $region32: #{tpu_custom_call.1} parent=1 // pred_region
      %v83 = vld [vmem:[#allocation2] sm:$0xff]
      %v84 = vld [vmem:[#allocation2 + $0x8] sm:$0xff]
      %v85 = vadd.f32 %v83, %v84
      %86 = vadd.xlane.f32.xlu0 %v85
      %v87 = vpop.xlane.xlu0 %86
      %v88 = vrot.slane %v87, 4
      %v89 = vadd.f32 %v87, %v88
      %v90 = vrot.slane %v89, 2
      %v91 = vadd.f32 %v89, %v90
      %v92 = vrot.slane %v91, 1
      %v93 = vadd.f32 %v91, %v92
      %s94 = vtos %v93
      %v95 = vld [vmem:[%s2] sm:$0x3]
      %v96 = vld [vmem:[%s3] sm:$0x3]
      %v97 = vmul.f32 %v96, 1.442695
      %v98 = vpow.pop %v97
      %v99 = vrcp.pop %v98
      %v100 = vmul.f32 1.0, %v99
      %v101 = vmul.f32 %v95, %v95
      %v102 = vadd.f32 %v101, %v98
      %v103 = vsub.f32 %v102, 1.0
      %v104 = vsub.f32 %v103, %v96
      %vm105 = vcmask 254976
      %v106 = vsel %vm105, %v104, 0.0
      %107 = vadd.xlane.f32.xlu0 %v106
      %v108 = vpop.xlane.xlu0 %107
      %v109 = vrot.slane %v108, 4
      %v110 = vadd.f32 %v108, %v109
      %v111 = vrot.slane %v110, 2
      %v112 = vadd.f32 %v110, %v111
      %v113 = vrot.slane %v112, 1
      %v114 = vadd.f32 %v112, %v113
      %s115 = vtos %v114
      %s116 = smul.f32 %s115, 0.5
      %s117 = smul.f32 %s116, 0.015625
      %v118 = vsel %vm105, %v98, 0.0
      %v119 = vrot.slane %v118, 4
      %v120 = vadd.f32 %v118, %v119
      %v121 = vrot.slane %v120, 2
      %v122 = vadd.f32 %v120, %v121
      %v123 = vrot.slane %v122, 1
      %v124 = vadd.f32 %v122, %v123
      %v125 = vsel %vm105, %v100, 0.0
      %v126 = vrot.slane %v125, 4
      %v127 = vadd.f32 %v125, %v126
      %v128 = vrot.slane %v127, 2
      %v129 = vadd.f32 %v127, %v128
      %v130 = vrot.slane %v129, 1
      %v131 = vadd.f32 %v129, %v130
      %v132 = vsel %vm105, %v95, 0.0
      %v133 = vrot.slane %v132, 4
      %v134 = vadd.f32 %v132, %v133
      %v135 = vrot.slane %v134, 2
      %v136 = vadd.f32 %v134, %v135
      %v137 = vrot.slane %v136, 1
      %v138 = vadd.f32 %v136, %v137
      %v139 = vsel %vm105, %v101, 0.0
      %v140 = vrot.slane %v139, 4
      %v141 = vadd.f32 %v139, %v140
      %v142 = vrot.slane %v141, 2
      %v143 = vadd.f32 %v141, %v142
      %v144 = vrot.slane %v143, 1
      %v145 = vadd.f32 %v143, %v144
      %v146 = vmul.f32 %v95, %v100
      %v147 = vsel %vm105, %v146, 0.0
      %v148 = vrot.slane %v147, 4
      %v149 = vadd.f32 %v147, %v148
      %v150 = vrot.slane %v149, 2
      %v151 = vadd.f32 %v149, %v150
      %v152 = vrot.slane %v151, 1
      %v153 = vadd.f32 %v151, %v152
      %v154 = vmul.f32 %v124, %v131
      %vm155 = vcmask 253952
      %v156 = vsel %vm155, %v154, 0.0
      %157 = vadd.xlane.f32.xlu0 %v156
      %v158 = vpop.xlane.xlu0 %157
      %v159 = vrot.slane %v158, 4
      %v160 = vadd.f32 %v158, %v159
      %v161 = vrot.slane %v160, 2
      %v162 = vadd.f32 %v160, %v161
      %v163 = vrot.slane %v162, 1
      %v164 = vadd.f32 %v162, %v163
      %s165 = vtos %v164
      %s166 = smul.f32 %s165, 0.25
      %v167 = vmul.f32 %v145, %v131
      %v168 = vsel %vm155, %v167, 0.0
      %169 = vadd.xlane.f32.xlu0 %v168
      %v170 = vpop.xlane.xlu0 %169
      %v171 = vrot.slane %v170, 4
      %v172 = vadd.f32 %v170, %v171
      %v173 = vrot.slane %v172, 2
      %v174 = vadd.f32 %v172, %v173
      %v175 = vrot.slane %v174, 1
      %v176 = vadd.f32 %v174, %v175
      %s177 = vtos %v176
      %s178 = smul.f32 %s177, 0.25
      %v179 = vmul.f32 %v138, %v153
      %v180 = vsel %vm155, %v179, 0.0
      %181 = vadd.xlane.f32.xlu0 %v180
      %v182 = vpop.xlane.xlu0 %181
      %v183 = vrot.slane %v182, 4
      %v184 = vadd.f32 %v182, %v183
      %v185 = vrot.slane %v184, 2
      %v186 = vadd.f32 %v184, %v185
      %v187 = vrot.slane %v186, 1
      %v188 = vadd.f32 %v186, %v187
      %s189 = vtos %v188
      %s190 = smul.f32 %s189, 0.25
      %v191 = vmul.f32 %v101, %v100
      %v192 = vsel %vm105, %v191, 0.0
      %193 = vadd.xlane.f32.xlu0 %v192
      %v194 = vpop.xlane.xlu0 %193
      %v195 = vrot.slane %v194, 4
      %v196 = vadd.f32 %v194, %v195
      %v197 = vrot.slane %v196, 2
      %v198 = vadd.f32 %v196, %v197
      %v199 = vrot.slane %v198, 1
      %v200 = vadd.f32 %v198, %v199
      %s201 = vtos %v200
      %s202 = smul.f32 %s201, 0.5
      %s203 = sadd.f32 %s166, %s178
      %s204 = smul.f32 %s190, 2.0
      %s205 = ssub.f32 %s203, %s204
      %s206 = sadd.f32 %s205, %s202
      %s207 = ssub.f32 %s206, 32.0
      %s208 = smul.f32 %s207, 0.5
      %s209 = scalar_lea.smem [#allocation8], 0
      %210 = sst [smem:[%s209]] %s94
      %s211 = sadd.f32 %s117, %s208
      %s212 = scalar_lea.smem [#allocation8], 1
      %213 = sst [smem:[%s212]] %s211
    $region33: #{tpu_custom_call.1} parent=1 // pred_fallthru
      _
    // Predicated region
    $region34: #{tpu_custom_call.1} parent=1 // pred_check
      _
    $region35: #{tpu_custom_call.1} parent=1 // pred_check_branch
      %215 = sbr.rel (0) target = $region37
    $region36: #{tpu_custom_call.1} parent=1 // pred_region
      %s217 = ssub.s32 16, 16
      %218 = vsyncadd [#allocation5], %s217
      %221 = dma.smem_to_hbm [#allocation8], 16, %s4, [#allocation5]
    $region37: #{tpu_custom_call.1} parent=1 // pred_fallthru
      _
    // Predicated region
    $region38: #{tpu_custom_call.1} parent=1 // pred_check
      _
    $region39: #{tpu_custom_call.1} parent=1 // pred_check_branch
      %223 = sbr.rel (0) target = $region41
    $region40: #{tpu_custom_call.1} parent=1 // pred_region
      %224 = dma.done [#allocation5], 16
    $region41: #{tpu_custom_call.1} parent=1 // pred_fallthru
      _
    %225 = sfence
    %226 = vsyncpa [#allocation4], 1
    %227 = vsyncpa [#allocation7], 1
    %228 = vsyncpa [#allocation5], 1

</llo_original>
